<compile_context>
chip_gen: v7x
topology: tpu7x:2x2x1
jax: 0.10.0
libtpu: 0.0.40
codegen_flags: <defaults>
</compile_context>

<pallas_src>
import functools

import jax
import jax.numpy as jnp
from jax.experimental import pallas as pl
from jax.experimental.pallas import tpu as pltpu

LANE = 128
BF16_SUBLANE = 16          # bf16 sublane tile is (16, 128)
_EPS = 1e-5


def _round_up(x, m):
    return ((x + m - 1) // m) * m


def _encoder_kernel(tok_ref, w_ref, vec_ref, out_ref, *, proj):
    """One modality per grid step: (Tp, dp) tokens -> MLP -> LN -> (Tp, dp)."""
    # vec rows (f32, each zero-padded to dp=128 lanes):
    #   0: b1   1: b2   2: b3   3: gamma   4: beta
    b1 = vec_ref[0, 0:1, :]
    b2 = vec_ref[0, 1:2, :]
    b3 = vec_ref[0, 2:3, :]
    gamma = vec_ref[0, 3:4, :]
    beta = vec_ref[0, 4:5, :]

    bf16 = jnp.bfloat16
    tok = tok_ref[0]                                     # (Tp, dp) bf16

    # ----- MLP: bf16 MXU operands, f32 accumulate, f32 VPU elementwise -----
    h = jnp.dot(tok, w_ref[0, 0], preferred_element_type=jnp.float32) + b1
    h = jnp.maximum(h, 0.0)                              # ReLU
    h = jnp.dot(h.astype(bf16), w_ref[0, 1],
                preferred_element_type=jnp.float32) + b2
    h = jnp.maximum(h, 0.0)                              # ReLU
    h = jnp.dot(h.astype(bf16), w_ref[0, 2],
                preferred_element_type=jnp.float32) + b3
    # Invariant: h lanes [proj:dp) are exactly zero (zero-padded w3 columns,
    # zero-padded b3, ReLU(0) == 0), so the unmasked lane reductions below
    # are exact reductions over the `proj` valid lanes -- no iota/mask needed.

    # ----- LayerNorm over the first `proj` lanes -----
    inv_n = 1.0 / proj
    mean = jnp.sum(h, axis=-1, keepdims=True) * inv_n
    ex2 = jnp.sum(h * h, axis=-1, keepdims=True) * inv_n
    var = ex2 - mean * mean
    inv_std = jax.lax.rsqrt(var + _EPS)
    # gamma/beta are zero in padded lanes -> padded output lanes stay zero.
    out_ref[0] = (h - mean) * inv_std * gamma + beta     # lane-dense store


@functools.partial(jax.jit, static_argnames=("token_size", "proj"))
def _encoder_forward(tok_p, w_stack, vec, *, token_size, proj):
    """Hot path: one pallas_call over grid=(num_modalities,), nothing else."""
    m, tp, dp = tok_p.shape
    flops = 2 * m * tp * 3 * dp * dp                      # advisory
    bytes_accessed = (tok_p.size * 2 + w_stack.size * 2 + vec.size * 4
                      + m * tp * dp * 4)
    out_padded = pl.pallas_call(
        functools.partial(_encoder_kernel, proj=proj),
        out_shape=jax.ShapeDtypeStruct((m, tp, dp), jnp.float32),
        grid=(m,),
        in_specs=[
            pl.BlockSpec((1, tp, dp), lambda i: (i, 0, 0)),
            pl.BlockSpec((1, 3, dp, dp), lambda i: (i, 0, 0, 0)),
            pl.BlockSpec((1, 5, dp), lambda i: (i, 0, 0)),
        ],
        out_specs=pl.BlockSpec((1, tp, dp), lambda i: (i, 0, 0)),
        compiler_params=pltpu.CompilerParams(
            dimension_semantics=("parallel",)),
        cost_estimate=pl.CostEstimate(flops=flops, transcendentals=0,
                                      bytes_accessed=bytes_accessed),
    )(tok_p, w_stack, vec)
    return out_padded[:, :token_size, :proj]


def pack_params(video_token, params):
    """Pad + pack parameters ONCE (hoisted out of the per-forward hot path).

    Returns a dict of packed device arrays with a leading modality axis of 1.
    Several encoders with identical dims can be batched by concatenating their
    packed 'tok'/'w'/'vec' arrays along axis 0; _encoder_forward then runs all
    of them under a single grid=(M,) pallas_call.
    """
    w1, b1, w2, b2, w3, b3, gamma, beta = params
    t, d_in = video_token.shape
    h1, h2, proj = w1.shape[1], w2.shape[1], w3.shape[1]

    # One common padded width so all three weight tiles stack into a single
    # (3, dp, dp) operand and every matmul is a full-lane (.., dp) x (dp, dp).
    dp = _round_up(max(d_in, h1, h2, proj), LANE)
    tp = _round_up(t, BF16_SUBLANE)

    def pad2(x, rows, cols):
        return jnp.zeros((rows, cols), jnp.float32).at[
            :x.shape[0], :x.shape[1]].set(x.astype(jnp.float32))

    def pad1(v):
        return jnp.zeros((dp,), jnp.float32).at[:v.shape[0]].set(
            v.astype(jnp.float32))

    bf16 = jnp.bfloat16
    tok_p = pad2(video_token, tp, dp).astype(bf16)[None]             # (1,Tp,dp)
    w_stack = jnp.stack([pad2(w1, dp, dp), pad2(w2, dp, dp),
                         pad2(w3, dp, dp)]).astype(bf16)[None]       # (1,3,dp,dp)
    vec = jnp.stack([pad1(b1), pad1(b2), pad1(b3),
                     pad1(gamma), pad1(beta)])[None]                 # (1,5,dp)
    return {"tok": tok_p, "w": w_stack, "vec": vec,
            "token_size": t, "proj": proj}


def modality_token_encoder(packed):
    """Forward of the (single-modality) ModalityTokenEncoder module."""
    out = _encoder_forward(packed["tok"], packed["w"], packed["vec"],
                           token_size=packed["token_size"],
                           proj=packed["proj"])
    return out[0]


def init_params(key, token_size, token_dim, projection_dim):
    """Deterministic synthetic init matching the module's parameter shapes."""
    ks = jax.random.split(key, 8)

    # video_token ~ Normal(0, std) with std = rand*0.5 + 0.1 (audio_variance)
    std = jax.random.uniform(ks[0], ()) * 0.5 + 0.1
    video_token = jax.random.normal(ks[1], (token_size, token_dim),
                                    jnp.float32) * std

    def linear(k, fan_in, fan_out):
        kw, kb = jax.random.split(k)
        bound = 1.0 / jnp.sqrt(fan_in)
        w = jax.random.uniform(kw, (fan_in, fan_out), jnp.float32,
                               -bound, bound)
        b = jax.random.uniform(kb, (fan_out,), jnp.float32, -bound, bound)
        return w, b

    w1, b1 = linear(ks[2], token_dim, 64)
    w2, b2 = linear(ks[3], 64, 128)
    w3, b3 = linear(ks[4], 128, projection_dim)
    gamma = jnp.ones((projection_dim,), jnp.float32)
    beta = jnp.zeros((projection_dim,), jnp.float32)
    return video_token, (w1, b1, w2, b2, w3, b3, gamma, beta)


if __name__ == "__main__":
    # CFG.token_size=8, CFG.token_dim=32, CFG.projection_dim=32.
    token_size, token_dim, projection_dim = 8, 32, 32

    key = jax.random.PRNGKey(0)
    video_token, params = init_params(key, token_size, token_dim,
                                      projection_dim)

    # Packing hoisted out of the hot path: done once here.
    packed = pack_params(video_token, params)
    out = jax.block_until_ready(modality_token_encoder(packed))
    # Second call exercises the cheap path (compiled call, packed operands).
    out = jax.block_until_ready(modality_token_encoder(packed))

    # Precision-matched pure-JAX reference (bf16 MXU operands, f32 elsewhere).
    w1, b1, w2, b2, w3, b3, gamma, beta = params
    bf, f32 = jnp.bfloat16, jnp.float32
    h = jnp.dot(video_token.astype(bf), w1.astype(bf),
                preferred_element_type=f32) + b1
    h = jnp.maximum(h, 0.0)
    h = jnp.dot(h.astype(bf), w2.astype(bf), preferred_element_type=f32) + b2
    h = jnp.maximum(h, 0.0)
    h = jnp.dot(h.astype(bf), w3.astype(bf), preferred_element_type=f32) + b3
    mu = h.mean(-1, keepdims=True)
    var = ((h - mu) ** 2).mean(-1, keepdims=True)
    ref = (h - mu) * jax.lax.rsqrt(var + _EPS) * gamma + beta

    assert out.shape == (token_size, projection_dim)
    assert jnp.allclose(out, ref, atol=2e-3, rtol=2e-3), \
        float(jnp.abs(out - ref).max())
    print("KERNEL_OK")
</pallas_src>

<mosaic_0001>
module attributes {stable_mosaic.version = 11 : i64} {
  func.func @_encoder_kernel(%arg0: i32, %arg1: memref<1x16x128xbf16, #tpu.memory_space<vmem>>, %arg2: memref<1x3x128x128xbf16, #tpu.memory_space<vmem>>, %arg3: memref<1x5x128xf32, #tpu.memory_space<vmem>>, %arg4: memref<1x16x128xf32, #tpu.memory_space<vmem>>) attributes {dimension_semantics = [#tpu.dimension_semantics<parallel>], iteration_bounds = array<i64: 1>, scalar_prefetch = 0 : i64, scratch_operands = 0 : i64, tpu.core_type = #tpu.core_type<tc>, window_params = [{transform_indices = @transform_0, window_bounds = array<i64: 1, 16, 128>}, {transform_indices = @transform_1, window_bounds = array<i64: 1, 3, 128, 128>}, {transform_indices = @transform_2, window_bounds = array<i64: 1, 5, 128>}, {transform_indices = @transform_3, window_bounds = array<i64: 1, 16, 128>}]} {
    %c0 = arith.constant 0 : index
    %c0_0 = arith.constant 0 : index
    %c0_1 = arith.constant 0 : index
    %0 = vector.load %arg3[%c0, %c0_0, %c0_1] : memref<1x5x128xf32, #tpu.memory_space<vmem>>, vector<1x1x128xf32>
    %1 = vector.shape_cast %0 : vector<1x1x128xf32> to vector<1x128xf32>
    %c0_2 = arith.constant 0 : index
    %c1 = arith.constant 1 : index
    %c0_3 = arith.constant 0 : index
    %2 = vector.load %arg3[%c0_2, %c1, %c0_3] : memref<1x5x128xf32, #tpu.memory_space<vmem>>, vector<1x1x128xf32>
    %3 = vector.shape_cast %2 : vector<1x1x128xf32> to vector<1x128xf32>
    %c0_4 = arith.constant 0 : index
    %c2 = arith.constant 2 : index
    %c0_5 = arith.constant 0 : index
    %4 = vector.load %arg3[%c0_4, %c2, %c0_5] : memref<1x5x128xf32, #tpu.memory_space<vmem>>, vector<1x1x128xf32>
    %5 = vector.shape_cast %4 : vector<1x1x128xf32> to vector<1x128xf32>
    %c0_6 = arith.constant 0 : index
    %c3 = arith.constant 3 : index
    %c0_7 = arith.constant 0 : index
    %6 = vector.load %arg3[%c0_6, %c3, %c0_7] : memref<1x5x128xf32, #tpu.memory_space<vmem>>, vector<1x1x128xf32>
    %7 = vector.shape_cast %6 : vector<1x1x128xf32> to vector<1x128xf32>
    %c0_8 = arith.constant 0 : index
    %c4 = arith.constant 4 : index
    %c0_9 = arith.constant 0 : index
    %8 = vector.load %arg3[%c0_8, %c4, %c0_9] : memref<1x5x128xf32, #tpu.memory_space<vmem>>, vector<1x1x128xf32>
    %9 = vector.shape_cast %8 : vector<1x1x128xf32> to vector<1x128xf32>
    %c0_10 = arith.constant 0 : index
    %c0_11 = arith.constant 0 : index
    %c0_12 = arith.constant 0 : index
    %10 = vector.load %arg1[%c0_10, %c0_11, %c0_12] : memref<1x16x128xbf16, #tpu.memory_space<vmem>>, vector<1x16x128xbf16>
    %11 = vector.shape_cast %10 : vector<1x16x128xbf16> to vector<16x128xbf16>
    %c0_13 = arith.constant 0 : index
    %c0_14 = arith.constant 0 : index
    %c0_15 = arith.constant 0 : index
    %c0_16 = arith.constant 0 : index
    %12 = vector.load %arg2[%c0_13, %c0_14, %c0_15, %c0_16] : memref<1x3x128x128xbf16, #tpu.memory_space<vmem>>, vector<1x1x128x128xbf16>
    %13 = vector.shape_cast %12 : vector<1x1x128x128xbf16> to vector<128x128xbf16>
    %cst = arith.constant dense<0.000000e+00> : vector<16x128xf32>
    %14 = tpu.matmul %11, %13, %cst {dimension_numbers = #tpu.dot_dimension_numbers<[1], [0], [0], [1], [0, 0, 1, 1], [], []>} : vector<16x128xbf16>, vector<128x128xbf16>, vector<16x128xf32> -> vector<16x128xf32>
    %15 = vector.broadcast %1 : vector<1x128xf32> to vector<16x128xf32>
    %16 = arith.addf %14, %15 : vector<16x128xf32>
    %cst_17 = arith.constant 0.000000e+00 : f32
    %17 = vector.broadcast %cst_17 : f32 to vector<16x128xf32>
    %18 = arith.maximumf %16, %17 : vector<16x128xf32>
    %19 = arith.truncf %18 : vector<16x128xf32> to vector<16x128xbf16>
    %c0_18 = arith.constant 0 : index
    %c1_19 = arith.constant 1 : index
    %c0_20 = arith.constant 0 : index
    %c0_21 = arith.constant 0 : index
    %20 = vector.load %arg2[%c0_18, %c1_19, %c0_20, %c0_21] : memref<1x3x128x128xbf16, #tpu.memory_space<vmem>>, vector<1x1x128x128xbf16>
    %21 = vector.shape_cast %20 : vector<1x1x128x128xbf16> to vector<128x128xbf16>
    %cst_22 = arith.constant dense<0.000000e+00> : vector<16x128xf32>
    %22 = tpu.matmul %19, %21, %cst_22 {dimension_numbers = #tpu.dot_dimension_numbers<[1], [0], [0], [1], [0, 0, 1, 1], [], []>} : vector<16x128xbf16>, vector<128x128xbf16>, vector<16x128xf32> -> vector<16x128xf32>
    %23 = vector.broadcast %3 : vector<1x128xf32> to vector<16x128xf32>
    %24 = arith.addf %22, %23 : vector<16x128xf32>
    %cst_23 = arith.constant 0.000000e+00 : f32
    %25 = vector.broadcast %cst_23 : f32 to vector<16x128xf32>
    %26 = arith.maximumf %24, %25 : vector<16x128xf32>
    %27 = arith.truncf %26 : vector<16x128xf32> to vector<16x128xbf16>
    %c0_24 = arith.constant 0 : index
    %c2_25 = arith.constant 2 : index
    %c0_26 = arith.constant 0 : index
    %c0_27 = arith.constant 0 : index
    %28 = vector.load %arg2[%c0_24, %c2_25, %c0_26, %c0_27] : memref<1x3x128x128xbf16, #tpu.memory_space<vmem>>, vector<1x1x128x128xbf16>
    %29 = vector.shape_cast %28 : vector<1x1x128x128xbf16> to vector<128x128xbf16>
    %cst_28 = arith.constant dense<0.000000e+00> : vector<16x128xf32>
    %30 = tpu.matmul %27, %29, %cst_28 {dimension_numbers = #tpu.dot_dimension_numbers<[1], [0], [0], [1], [0, 0, 1, 1], [], []>} : vector<16x128xbf16>, vector<128x128xbf16>, vector<16x128xf32> -> vector<16x128xf32>
    %31 = vector.broadcast %5 : vector<1x128xf32> to vector<16x128xf32>
    %32 = arith.addf %30, %31 : vector<16x128xf32>
    %cst_29 = arith.constant dense<0.000000e+00> : vector<16xf32>
    %33 = vector.multi_reduction <add>, %32, %cst_29 [1] : vector<16x128xf32> to vector<16xf32>
    %34 = vector.shape_cast %33 : vector<16xf32> to vector<16x1xf32>
    %cst_30 = arith.constant 3.125000e-02 : f32
    %35 = vector.broadcast %cst_30 : f32 to vector<16x1xf32>
    %36 = arith.mulf %34, %35 : vector<16x1xf32>
    %37 = arith.mulf %32, %32 : vector<16x128xf32>
    %cst_31 = arith.constant dense<0.000000e+00> : vector<16xf32>
    %38 = vector.multi_reduction <add>, %37, %cst_31 [1] : vector<16x128xf32> to vector<16xf32>
    %39 = vector.shape_cast %38 : vector<16xf32> to vector<16x1xf32>
    %cst_32 = arith.constant 3.125000e-02 : f32
    %40 = vector.broadcast %cst_32 : f32 to vector<16x1xf32>
    %41 = arith.mulf %39, %40 : vector<16x1xf32>
    %42 = arith.mulf %36, %36 : vector<16x1xf32>
    %43 = arith.subf %41, %42 : vector<16x1xf32>
    %cst_33 = arith.constant 9.99999974E-6 : f32
    %44 = vector.broadcast %cst_33 : f32 to vector<16x1xf32>
    %45 = arith.addf %43, %44 : vector<16x1xf32>
    %46 = math.rsqrt %45 : vector<16x1xf32>
    %47 = vector.broadcast %36 : vector<16x1xf32> to vector<16x128xf32>
    %48 = arith.subf %32, %47 : vector<16x128xf32>
    %49 = vector.broadcast %46 : vector<16x1xf32> to vector<16x128xf32>
    %50 = arith.mulf %48, %49 : vector<16x128xf32>
    %51 = vector.broadcast %7 : vector<1x128xf32> to vector<16x128xf32>
    %52 = arith.mulf %50, %51 : vector<16x128xf32>
    %53 = vector.broadcast %9 : vector<1x128xf32> to vector<16x128xf32>
    %54 = arith.addf %52, %53 : vector<16x128xf32>
    %c0_34 = arith.constant 0 : index
    %c0_35 = arith.constant 0 : index
    %c0_36 = arith.constant 0 : index
    %55 = vector.load %arg4[%c0_34, %c0_35, %c0_36] : memref<1x16x128xf32, #tpu.memory_space<vmem>>, vector<1x16x128xf32>
    %56 = vector.shape_cast %55 : vector<1x16x128xf32> to vector<16x128xf32>
    %57 = vector.shape_cast %54 : vector<16x128xf32> to vector<1x16x128xf32>
    tpu.vector_store %arg4[%c0_34, %c0_35, %c0_36], %57 {strides = array<i32>} : memref<1x16x128xf32, #tpu.memory_space<vmem>>, vector<1x16x128xf32>,
    return
  }
  func.func @transform_0(%arg0: i32) -> (i32, i32, i32) {
    %c0_i32 = arith.constant 0 : i32
    %c0_i32_0 = arith.constant 0 : i32
    %c0_i32_1 = arith.constant 0 : i32
    return %arg0, %c0_i32, %c0_i32_0 : i32, i32, i32
  }
  func.func @transform_1(%arg0: i32) -> (i32, i32, i32, i32) {
    %c0_i32 = arith.constant 0 : i32
    %c0_i32_0 = arith.constant 0 : i32
    %c0_i32_1 = arith.constant 0 : i32
    %c0_i32_2 = arith.constant 0 : i32
    return %arg0, %c0_i32, %c0_i32_0, %c0_i32_1 : i32, i32, i32, i32
  }
  func.func @transform_2(%arg0: i32) -> (i32, i32, i32) {
    %c0_i32 = arith.constant 0 : i32
    %c0_i32_0 = arith.constant 0 : i32
    %c0_i32_1 = arith.constant 0 : i32
    return %arg0, %c0_i32, %c0_i32_0 : i32, i32, i32
  }
  func.func @transform_3(%arg0: i32) -> (i32, i32, i32) {
    %c0_i32 = arith.constant 0 : i32
    %c0_i32_0 = arith.constant 0 : i32
    %c0_i32_1 = arith.constant 0 : i32
    return %arg0, %c0_i32, %c0_i32_0 : i32, i32, i32
  }
}

</mosaic_0001>

<llo_original>
// kernel: _encoder_forward.1
$region0: #{_encoder_forward.1}
  #allocation0 [shape = 'u32[]', space=smem, size = 0x4, offset = 0x4, fixed_abs, tag = 'smem constant byte address 0x4 - core index']
  #allocation1 [shape = 'u32[144,128]{1,0:T(1,128)}', space=vmem, size = 0x12000, scoped, tag = 'internal scratch']
  %s0 = inlined_call_operand.vmem [shape: bf16[1,16,128], index: 0, kind: input, shape index: {}]
  %s1 = inlined_call_operand.hbm [shape: bf16[1,3,128,128], index: 1, kind: input, shape index: {}]
  %s2 = inlined_call_operand.vmem [shape: f32[1,5,128], index: 2, kind: input, shape index: {}]
  %s3 = inlined_call_operand.vmem [shape: f32[1,16,128], index: 3, kind: output, shape index: {}]
  %s4 = sld [smem:[#allocation0]]
  $region26: #{_encoder_forward.1} parent=0
    _
  %s6 = ssub.s32 1, %s4
  %s7 = scalar_select 0, %s6, %s4
  $region1: #{_encoder_forward.1} parent=0
    #allocation2 [shape = 'u8[98304]{0}', space=vmem, size = 0x18000, scoped, tag = 'input window, operand 1, single buffered']
    #allocation3 [shape = 's32[1]{0}', space=sflag, size = 0x4, scoped, tag = 'scoped memory for _encoder_forward.1']
    %8 = vsyncpa [#allocation3], 0
    // Predicated region
    $region2: #{_encoder_forward.1} parent=1 // pred_check
      _
    $region3: #{_encoder_forward.1} parent=1 // pred_check_branch
      %10 = sbr.rel (0) target = $region5
    $region4: #{_encoder_forward.1} parent=1 // pred_region
      _
    $region5: #{_encoder_forward.1} parent=1 // pred_fallthru
      _
    // Predicated region
    $region6: #{_encoder_forward.1} parent=1 // pred_check
      _
    $region7: #{_encoder_forward.1} parent=1 // pred_check_branch
      %12 = sbr.rel (0) target = $region9
    $region8: #{_encoder_forward.1} parent=1 // pred_region
      %s14 = ssub.s32 3072, 3072
      %15 = vsyncadd [#allocation3], %s14
      %s16 = sshll.u32 [#allocation2], 4
      %s17 = int_to_ptr.vmem [resolvable:$true] %s16
      %22 = dma.hbm_to_vmem [thread:$0]  %s1, 3072, %s17, [#allocation3], 64, 64, 4
    $region9: #{_encoder_forward.1} parent=1 // pred_fallthru
      _
    // Predicated region
    $region10: #{_encoder_forward.1} parent=1 // pred_check
      _
    $region11: #{_encoder_forward.1} parent=1 // pred_check_branch
      %24 = sbr.rel (0) target = $region13
    $region12: #{_encoder_forward.1} parent=1 // pred_region
      _
    $region13: #{_encoder_forward.1} parent=1 // pred_fallthru
      _
    // Predicated region
    $region14: #{_encoder_forward.1} parent=1 // pred_check
      _
    $region15: #{_encoder_forward.1} parent=1 // pred_check_branch
      %26 = sbr.rel (0) target = $region17
    $region16: #{_encoder_forward.1} parent=1 // pred_region
      %27 = dma.done [#allocation3], 3072
    $region17: #{_encoder_forward.1} parent=1 // pred_fallthru
      _
    %v29 = vld [vmem:[%s2] sm:$0x1]
    %v30 = vld [vmem:[%s2 + $0x1] sm:$0x1]
    %v31 = vld [vmem:[%s2 + $0x2] sm:$0x1]
    %v32 = vld [vmem:[%s2 + $0x3] sm:$0x1]
    %v33 = vld [vmem:[%s2 + $0x4] sm:$0x1]
    %v34 = vld [vmem:[%s0] sm:$0xf]
    %v35 = vld [vmem:[%s0 + $0x4] sm:$0xf]
    %v36 = vld [vmem:[#allocation2] sm:$0xf]
    %v37 = vld [vmem:[#allocation2 + $0x4] sm:$0xf]
    %v38 = vld [vmem:[#allocation2 + $0x8] sm:$0xf]
    %v39 = vld [vmem:[#allocation2 + $0xc] sm:$0xf]
    %v40 = vld [vmem:[#allocation2 + $0x10] sm:$0xf]
    %v41 = vld [vmem:[#allocation2 + $0x14] sm:$0xf]
    %v42 = vld [vmem:[#allocation2 + $0x18] sm:$0xf]
    %v43 = vld [vmem:[#allocation2 + $0x1c] sm:$0xf]
    %v44 = vld [vmem:[#allocation2 + $0x20] sm:$0xf]
    %v45 = vld [vmem:[#allocation2 + $0x24] sm:$0xf]
    %v46 = vld [vmem:[#allocation2 + $0x28] sm:$0xf]
    %v47 = vld [vmem:[#allocation2 + $0x2c] sm:$0xf]
    %v48 = vld [vmem:[#allocation2 + $0x30] sm:$0xf]
    %v49 = vld [vmem:[#allocation2 + $0x34] sm:$0xf]
    %v50 = vld [vmem:[#allocation2 + $0x38] sm:$0xf]
    %v51 = vld [vmem:[#allocation2 + $0x3c] sm:$0xf]
    %v52 = vlaneseq
    %v53 = vshrl.u32 %v52, 7
    %v54 = vsub.s32 0, %v53
    %v55 = vrot.slane %v29, %v54
    %v58 = vunpack.c.l.b16 %v34
    %v59 = vunpack.c.l.b16 %v35
    %v60 = vpack.c.b16 %v59, %v58
    %v78 = vunpack.c.l.b16 %v36
    %v79 = vunpack.c.l.b16 %v37
    %v80 = vunpack.c.l.b16 %v38
    %v81 = vunpack.c.l.b16 %v39
    %v82 = vunpack.c.l.b16 %v40
    %v83 = vunpack.c.l.b16 %v41
    %v84 = vunpack.c.l.b16 %v42
    %v85 = vunpack.c.l.b16 %v43
    %v86 = vunpack.c.l.b16 %v44
    %v87 = vunpack.c.l.b16 %v45
    %v88 = vunpack.c.l.b16 %v46
    %v89 = vunpack.c.l.b16 %v47
    %v90 = vunpack.c.l.b16 %v48
    %v91 = vunpack.c.l.b16 %v49
    %v92 = vunpack.c.l.b16 %v50
    %v93 = vunpack.c.l.b16 %v51
    %v94 = vpack.c.b16 %v79, %v78
    %v95 = vpack.c.b16 %v81, %v80
    %v96 = vpack.c.b16 %v83, %v82
    %v97 = vpack.c.b16 %v85, %v84
    %v98 = vpack.c.b16 %v87, %v86
    %v99 = vpack.c.b16 %v89, %v88
    %v100 = vpack.c.b16 %v91, %v90
    %v101 = vpack.c.b16 %v93, %v92
    %110 = vmatprep.subr.bf16.mxu0 0
    %111 = vmatpush1.bf16.msra.mxu0 %v94
    %112 = vmatprep.subr.bf16.mxu0 0
    %113 = vmatpush1.bf16.msra.mxu0 %v95
    %114 = vmatprep.subr.bf16.mxu0 0
    %115 = vmatpush1.bf16.msra.mxu0 %v96
    %116 = vmatprep.subr.bf16.mxu0 0
    %117 = vmatpush1.bf16.msra.mxu0 %v97
    %118 = vmatprep.subr.bf16.mxu0 0
    %119 = vmatpush1.bf16.msra.mxu0 %v98
    %120 = vmatprep.subr.bf16.mxu0 0
    %121 = vmatpush1.bf16.msra.mxu0 %v99
    %122 = vmatprep.subr.bf16.mxu0 0
    %123 = vmatpush1.bf16.msra.mxu0 %v100
    %124 = vmatprep.subr.bf16.mxu0 0
    %125 = vmatpush1.bf16.msra.mxu0 %v101
    %126 = vmatprep.subr.bf16.mxu0 0
    %127 = vmatpush1.bf16.msra.mxu0 0
    %128 = vmatprep.subr.bf16.mxu0 0
    %129 = vmatpush1.bf16.msra.mxu0 0
    %130 = vmatprep.subr.bf16.mxu0 0
    %131 = vmatpush1.bf16.msra.mxu0 0
    %132 = vmatprep.subr.bf16.mxu0 0
    %133 = vmatpush1.bf16.msra.mxu0 0
    %134 = vmatprep.subr.bf16.mxu0 0
    %135 = vmatpush1.bf16.msra.mxu0 0
    %136 = vmatprep.subr.bf16.mxu0 0
    %137 = vmatpush1.bf16.msra.mxu0 0
    %138 = vmatprep.subr.bf16.mxu0 0
    %139 = vmatpush1.bf16.msra.mxu0 0
    %140 = vmatprep.subr.bf16.mxu0 0
    %141 = vmatpush1.bf16.msra.mxu0 0
    %142 = vmatprep.mubr.bf16.mxu0 0
    %143 = vmatmul.mubr.bf16.gmra.mrb[0].mxu0 %v60
    %v144 = vpop.f32.mrb[0].mxu0
    %v145 = vadd.f32 %v55, %v144
    %v146 = vpop.f32.mrb[0].mxu0
    %v147 = vpop.f32.mrb[0].mxu0
    %v148 = vadd.f32 %v55, %v147
    %v149 = vpop.f32.mrb[0].mxu0
    %150 = vdwg.mxu0
    %v151 = vmax.f32 %v145, 0.0
    %v152 = vmax.f32 %v148, 0.0
    %v153 = vpack.c.bf16 %v152, %v151
    %s154 = scalar_lea.vmem [#allocation2], 64
    %v155 = vld [vmem:[%s154] sm:$0xf]
    %v156 = vld [vmem:[%s154 + $0x4] sm:$0xf]
    %v157 = vld [vmem:[%s154 + $0x8] sm:$0xf]
    %v158 = vld [vmem:[%s154 + $0xc] sm:$0xf]
    %v159 = vld [vmem:[%s154 + $0x10] sm:$0xf]
    %v160 = vld [vmem:[%s154 + $0x14] sm:$0xf]
    %v161 = vld [vmem:[%s154 + $0x18] sm:$0xf]
    %v162 = vld [vmem:[%s154 + $0x1c] sm:$0xf]
    %v163 = vld [vmem:[%s154 + $0x20] sm:$0xf]
    %v164 = vld [vmem:[%s154 + $0x24] sm:$0xf]
    %v165 = vld [vmem:[%s154 + $0x28] sm:$0xf]
    %v166 = vld [vmem:[%s154 + $0x2c] sm:$0xf]
    %v167 = vld [vmem:[%s154 + $0x30] sm:$0xf]
    %v168 = vld [vmem:[%s154 + $0x34] sm:$0xf]
    %v169 = vld [vmem:[%s154 + $0x38] sm:$0xf]
    %v170 = vld [vmem:[%s154 + $0x3c] sm:$0xf]
    %v171 = vlaneseq
    %v172 = vshrl.u32 %v171, 7
    %v173 = vsub.s32 0, %v172
    %v174 = vrot.slane %v30, %v173
    %v191 = vunpack.c.l.b16 %v155
    %v192 = vunpack.c.l.b16 %v156
    %v193 = vunpack.c.l.b16 %v157
    %v194 = vunpack.c.l.b16 %v158
    %v195 = vunpack.c.l.b16 %v159
    %v196 = vunpack.c.l.b16 %v160
    %v197 = vunpack.c.l.b16 %v161
    %v198 = vunpack.c.l.b16 %v162
    %v199 = vunpack.c.l.b16 %v163
    %v200 = vunpack.c.l.b16 %v164
    %v201 = vunpack.c.l.b16 %v165
    %v202 = vunpack.c.l.b16 %v166
    %v203 = vunpack.c.l.b16 %v167
    %v204 = vunpack.c.l.b16 %v168
    %v205 = vunpack.c.l.b16 %v169
    %v206 = vunpack.c.l.b16 %v170
    %v207 = vpack.c.b16 %v192, %v191
    %v208 = vpack.c.b16 %v194, %v193
    %v209 = vpack.c.b16 %v196, %v195
    %v210 = vpack.c.b16 %v198, %v197
    %v211 = vpack.c.b16 %v200, %v199
    %v212 = vpack.c.b16 %v202, %v201
    %v213 = vpack.c.b16 %v204, %v203
    %v214 = vpack.c.b16 %v206, %v205
    %223 = vmatprep.subr.bf16.mxu0 0
    %224 = vmatpush1.bf16.msra.mxu0 %v207
    %225 = vmatprep.subr.bf16.mxu0 0
    %226 = vmatpush1.bf16.msra.mxu0 %v208
    %227 = vmatprep.subr.bf16.mxu0 0
    %228 = vmatpush1.bf16.msra.mxu0 %v209
    %229 = vmatprep.subr.bf16.mxu0 0
    %230 = vmatpush1.bf16.msra.mxu0 %v210
    %231 = vmatprep.subr.bf16.mxu0 0
    %232 = vmatpush1.bf16.msra.mxu0 %v211
    %233 = vmatprep.subr.bf16.mxu0 0
    %234 = vmatpush1.bf16.msra.mxu0 %v212
    %235 = vmatprep.subr.bf16.mxu0 0
    %236 = vmatpush1.bf16.msra.mxu0 %v213
    %237 = vmatprep.subr.bf16.mxu0 0
    %238 = vmatpush1.bf16.msra.mxu0 %v214
    %239 = vmatprep.subr.bf16.mxu0 0
    %240 = vmatpush1.bf16.msra.mxu0 0
    %241 = vmatprep.subr.bf16.mxu0 0
    %242 = vmatpush1.bf16.msra.mxu0 0
    %243 = vmatprep.subr.bf16.mxu0 0
    %244 = vmatpush1.bf16.msra.mxu0 0
    %245 = vmatprep.subr.bf16.mxu0 0
    %246 = vmatpush1.bf16.msra.mxu0 0
    %247 = vmatprep.subr.bf16.mxu0 0
    %248 = vmatpush1.bf16.msra.mxu0 0
    %249 = vmatprep.subr.bf16.mxu0 0
    %250 = vmatpush1.bf16.msra.mxu0 0
    %251 = vmatprep.subr.bf16.mxu0 0
    %252 = vmatpush1.bf16.msra.mxu0 0
    %253 = vmatprep.subr.bf16.mxu0 0
    %254 = vmatpush1.bf16.msra.mxu0 0
    %255 = vmatprep.mubr.bf16.mxu0 0
    %256 = vmatmul.mubr.bf16.gmra.mrb[0].mxu0 %v153
    %v257 = vpop.f32.mrb[0].mxu0
    %v258 = vadd.f32 %v174, %v257
    %v259 = vpop.f32.mrb[0].mxu0
    %v260 = vpop.f32.mrb[0].mxu0
    %v261 = vadd.f32 %v174, %v260
    %v262 = vpop.f32.mrb[0].mxu0
    %263 = vdwg.mxu0
    %v264 = vmax.f32 %v258, 0.0
    %v265 = vmax.f32 %v261, 0.0
    %v266 = vpack.c.bf16 %v265, %v264
    %s267 = scalar_lea.vmem [#allocation2], 128
    %v268 = vld [vmem:[%s267] sm:$0xf]
    %v269 = vld [vmem:[%s267 + $0x4] sm:$0xf]
    %v270 = vld [vmem:[%s267 + $0x8] sm:$0xf]
    %v271 = vld [vmem:[%s267 + $0xc] sm:$0xf]
    %v272 = vld [vmem:[%s267 + $0x10] sm:$0xf]
    %v273 = vld [vmem:[%s267 + $0x14] sm:$0xf]
    %v274 = vld [vmem:[%s267 + $0x18] sm:$0xf]
    %v275 = vld [vmem:[%s267 + $0x1c] sm:$0xf]
    %v276 = vld [vmem:[%s267 + $0x20] sm:$0xf]
    %v277 = vld [vmem:[%s267 + $0x24] sm:$0xf]
    %v278 = vld [vmem:[%s267 + $0x28] sm:$0xf]
    %v279 = vld [vmem:[%s267 + $0x2c] sm:$0xf]
    %v280 = vld [vmem:[%s267 + $0x30] sm:$0xf]
    %v281 = vld [vmem:[%s267 + $0x34] sm:$0xf]
    %v282 = vld [vmem:[%s267 + $0x38] sm:$0xf]
    %v283 = vld [vmem:[%s267 + $0x3c] sm:$0xf]
    %v284 = vlaneseq
    %v285 = vshrl.u32 %v284, 7
    %v286 = vsub.s32 0, %v285
    %v287 = vrot.slane %v31, %v286
    %v304 = vunpack.c.l.b16 %v268
    %v305 = vunpack.c.l.b16 %v269
    %v306 = vunpack.c.l.b16 %v270
    %v307 = vunpack.c.l.b16 %v271
    %v308 = vunpack.c.l.b16 %v272
    %v309 = vunpack.c.l.b16 %v273
    %v310 = vunpack.c.l.b16 %v274
    %v311 = vunpack.c.l.b16 %v275
    %v312 = vunpack.c.l.b16 %v276
    %v313 = vunpack.c.l.b16 %v277
    %v314 = vunpack.c.l.b16 %v278
    %v315 = vunpack.c.l.b16 %v279
    %v316 = vunpack.c.l.b16 %v280
    %v317 = vunpack.c.l.b16 %v281
    %v318 = vunpack.c.l.b16 %v282
    %v319 = vunpack.c.l.b16 %v283
    %v320 = vpack.c.b16 %v305, %v304
    %v321 = vpack.c.b16 %v307, %v306
    %v322 = vpack.c.b16 %v309, %v308
    %v323 = vpack.c.b16 %v311, %v310
    %v324 = vpack.c.b16 %v313, %v312
    %v325 = vpack.c.b16 %v315, %v314
    %v326 = vpack.c.b16 %v317, %v316
    %v327 = vpack.c.b16 %v319, %v318
    %336 = vmatprep.subr.bf16.mxu0 0
    %337 = vmatpush1.bf16.msra.mxu0 %v320
    %338 = vmatprep.subr.bf16.mxu0 0
    %339 = vmatpush1.bf16.msra.mxu0 %v321
    %340 = vmatprep.subr.bf16.mxu0 0
    %341 = vmatpush1.bf16.msra.mxu0 %v322
    %342 = vmatprep.subr.bf16.mxu0 0
    %343 = vmatpush1.bf16.msra.mxu0 %v323
    %344 = vmatprep.subr.bf16.mxu0 0
    %345 = vmatpush1.bf16.msra.mxu0 %v324
    %346 = vmatprep.subr.bf16.mxu0 0
    %347 = vmatpush1.bf16.msra.mxu0 %v325
    %348 = vmatprep.subr.bf16.mxu0 0
    %349 = vmatpush1.bf16.msra.mxu0 %v326
    %350 = vmatprep.subr.bf16.mxu0 0
    %351 = vmatpush1.bf16.msra.mxu0 %v327
    %352 = vmatprep.subr.bf16.mxu0 0
    %353 = vmatpush1.bf16.msra.mxu0 0
    %354 = vmatprep.subr.bf16.mxu0 0
    %355 = vmatpush1.bf16.msra.mxu0 0
    %356 = vmatprep.subr.bf16.mxu0 0
    %357 = vmatpush1.bf16.msra.mxu0 0
    %358 = vmatprep.subr.bf16.mxu0 0
    %359 = vmatpush1.bf16.msra.mxu0 0
    %360 = vmatprep.subr.bf16.mxu0 0
    %361 = vmatpush1.bf16.msra.mxu0 0
    %362 = vmatprep.subr.bf16.mxu0 0
    %363 = vmatpush1.bf16.msra.mxu0 0
    %364 = vmatprep.subr.bf16.mxu0 0
    %365 = vmatpush1.bf16.msra.mxu0 0
    %366 = vmatprep.subr.bf16.mxu0 0
    %367 = vmatpush1.bf16.msra.mxu0 0
    %368 = vmatprep.mubr.bf16.mxu0 0
    %369 = vmatmul.mubr.bf16.gmra.mrb[0].mxu0 %v266
    %v370 = vpop.f32.mrb[0].mxu0
    %v371 = vadd.f32 %v287, %v370
    %v372 = vpop.f32.mrb[0].mxu0
    %v373 = vpop.f32.mrb[0].mxu0
    %v374 = vadd.f32 %v287, %v373
    %v375 = vpop.f32.mrb[0].mxu0
    %376 = vdwg.mxu0
    %377 = vadd.xlane.f32.xlu0 %v371
    %v378 = vpop.xlane.xlu0 %377
    %379 = vadd.xlane.f32.xlu0 %v374
    %v380 = vpop.xlane.xlu0 %379
    %v381 = vmul.f32 %v378, 0.03125
    %v382 = vmul.f32 %v380, 0.03125
    %v383 = vmul.f32 %v371, %v371
    %v384 = vmul.f32 %v374, %v374
    %385 = vadd.xlane.f32.xlu0 %v383
    %v386 = vpop.xlane.xlu0 %385
    %387 = vadd.xlane.f32.xlu0 %v384
    %v388 = vpop.xlane.xlu0 %387
    %v389 = vmul.f32 %v386, 0.03125
    %v390 = vmul.f32 %v388, 0.03125
    %v391 = vmul.f32 %v381, %v381
    %v392 = vmul.f32 %v382, %v382
    %v393 = vsub.f32 %v389, %v391
    %v394 = vsub.f32 %v390, %v392
    %v395 = vadd.f32 %v393, 1e-05
    %v396 = vadd.f32 %v394, 1e-05
    %v397 = vrsqrt.pop %v395
    %v398 = vrsqrt.pop %v396
    %v399 = vsub.f32 %v371, %v381
    %v400 = vsub.f32 %v374, %v382
    %v401 = vmul.f32 %v399, %v397
    %v402 = vmul.f32 %v400, %v398
    %v403 = vlaneseq
    %v404 = vshrl.u32 %v403, 7
    %v405 = vsub.s32 0, %v404
    %v406 = vrot.slane %v32, %v405
    %v407 = vmul.f32 %v401, %v406
    %v408 = vmul.f32 %v402, %v406
    %v409 = vlaneseq
    %v410 = vshrl.u32 %v409, 7
    %v411 = vsub.s32 0, %v410
    %v412 = vrot.slane %v33, %v411
    %v413 = vadd.f32 %v407, %v412
    %v414 = vadd.f32 %v408, %v412
    %415 = vst [vmem:[%s3] sm:$0xff] %v413
    %416 = vst [vmem:[%s3 + $0x8] sm:$0xff] %v414
    // Predicated region
    $region18: #{_encoder_forward.1} parent=1 // pred_check
      _
    $region19: #{_encoder_forward.1} parent=1 // pred_check_branch
      %418 = sbr.rel (0) target = $region21
    $region20: #{_encoder_forward.1} parent=1 // pred_region
      _
    $region21: #{_encoder_forward.1} parent=1 // pred_fallthru
      _
    // Predicated region
    $region22: #{_encoder_forward.1} parent=1 // pred_check
      _
    $region23: #{_encoder_forward.1} parent=1 // pred_check_branch
      %420 = sbr.rel (0) target = $region25
    $region24: #{_encoder_forward.1} parent=1 // pred_region
      _
    $region25: #{_encoder_forward.1} parent=1 // pred_fallthru
      _
    %421 = vsyncpa [#allocation3], 1

</llo_original>
